<compile_context>
chip_gen: v7x
topology: tpu7x:2x2x1
jax: 0.10.0
libtpu: 0.0.40
codegen_flags: <defaults>
</compile_context>

<pallas_src>
import jax
import jax.numpy as jnp
from jax import lax
from jax.experimental import pallas as pl
from jax.experimental.pallas import tpu as pltpu

EPSILON = 1e-7

# small, module-consistent shapes
N, C, H, W = 2, 3, 16, 16
HW = H * W
CHW = C * HW          # 768 (multiple of 128 -> lane dense)
K = 10                # num classes
K_PAD = 16            # padded class dim (weight stored transposed: (K_PAD, CHW))
TILE_N = 128          # batch tile for large-batch grid


def regression_kernel(x_ref, params_ref, w_ref, b_ref, out_ref):
    # x_ref      : VMEM (tile, CHW)    f32   flattened, zero-padded batch tile
    # params_ref : VMEM (4, CHW)       f32   row 0: mask_tanh (tiled over channels)
    #                                        row 1: pattern_tanh (flattened channel-major)
    #                                        row 2: scale  = 1/std   (per-lane broadcast)
    #                                        row 3: shift  = -mean/std
    # w_ref      : VMEM (K_PAD, CHW)   bf16  transposed, zero-padded classifier weight
    # b_ref      : VMEM (1, K_PAD)     f32   zero-padded classifier bias
    # out_ref    : VMEM (tile, K_PAD)  f32
    inv = 1.0 / (2.0 + EPSILON)

    # f32 elementwise path (EUP tanh + VPU blend) -- kept f32 for v5e
    mask = jnp.tanh(params_ref[0:1, :]) * inv + 0.5                  # (1, CHW)
    pat = jnp.tanh(params_ref[1:2, :]) * inv + 0.5                   # (1, CHW)
    pat = pat * params_ref[2:3, :] + params_ref[3:4, :]              # (p - mean)/std

    x = x_ref[...]
    blended = x + mask * (pat - x)                                   # (tile, CHW), f32

    # bf16 MXU contraction against the transposed (K_PAD, CHW) weight; f32 accumulate.
    logits = lax.dot_general(
        blended.astype(jnp.bfloat16), w_ref[...],
        dimension_numbers=(((1,), (1,)), ((), ())),
        preferred_element_type=jnp.float32)                          # (tile, K_PAD)
    out_ref[...] = logits + b_ref[...]


def pack_frozen_constants(w_flat, b, mean, std):
    """Run ONCE outside the optimization loop (classifier + normalizer are frozen).

    w_flat: (CHW, K) f32; b: (K,) f32; mean/std: (C,) f32.
    Returns (const_rows (2, CHW) f32, w_t (K_PAD, CHW) bf16, b_pad (1, K_PAD) f32)."""
    inv_std = 1.0 / std
    scale_row = jnp.repeat(inv_std, HW).reshape(1, CHW)              # 1/std per lane
    shift_row = jnp.repeat(-mean * inv_std, HW).reshape(1, CHW)      # -mean/std per lane
    const_rows = jnp.concatenate([scale_row, shift_row], axis=0)     # (2, CHW) f32

    w_t = jnp.zeros((K_PAD, CHW), jnp.float32).at[:K, :].set(w_flat.T)
    w_t = w_t.astype(jnp.bfloat16)                                   # (K_PAD, CHW) bf16
    b_pad = jnp.zeros((1, K_PAD), jnp.float32).at[0, :K].set(b)
    return const_rows, w_t, b_pad


def regression_forward(x, mask_tanh, pattern_tanh, const_rows, w_t, b_pad):
    """x: (n, C, H, W); mask_tanh: (1, H, W); pattern_tanh: (1, C, H, W);
    const_rows/w_t/b_pad: outputs of pack_frozen_constants (hoisted)."""
    n = x.shape[0]

    # Per-step packing: only the trainable mask/pattern rows are rebuilt each call.
    mask_row = jnp.tile(mask_tanh.reshape(1, HW), (1, C))            # (1, CHW)
    pat_row = pattern_tanh.reshape(1, CHW)                           # (1, CHW)
    params = jnp.concatenate([mask_row, pat_row, const_rows], axis=0)  # (4, CHW)

    # Batch padding / tiling: small batches -> single block; large batches -> parallel grid.
    if n <= TILE_N:
        n_pad = ((n + 7) // 8) * 8
        tile = n_pad
    else:
        n_pad = pl.cdiv(n, TILE_N) * TILE_N
        tile = TILE_N
    grid = n_pad // tile

    x2 = x.reshape(n, CHW)
    x2 = jnp.pad(x2, ((0, n_pad - n), (0, 0)))                       # (n_pad, CHW)

    out_pad = pl.pallas_call(
        regression_kernel,
        out_shape=jax.ShapeDtypeStruct((n_pad, K_PAD), jnp.float32),
        grid=(grid,),
        in_specs=[
            pl.BlockSpec((tile, CHW), lambda i: (i, 0)),   # x tile (varies over grid)
            pl.BlockSpec((4, CHW), lambda i: (0, 0)),      # packed mask/pattern/scale/shift
            pl.BlockSpec((K_PAD, CHW), lambda i: (0, 0)),  # frozen weight (resident)
            pl.BlockSpec((1, K_PAD), lambda i: (0, 0)),    # frozen bias (resident)
        ],
        out_specs=pl.BlockSpec((tile, K_PAD), lambda i: (i, 0)),
        compiler_params=pltpu.CompilerParams(
            dimension_semantics=("parallel",)),            # splits batch tiles across TCs on v7x
    )(x2, params, w_t, b_pad)

    return out_pad[:n, :K]


def regression_reference(x, mask_tanh, pattern_tanh, mean, std, w_flat, b):
    mask = jnp.tanh(mask_tanh) / (2.0 + EPSILON) + 0.5               # (1,H,W)
    pattern = jnp.tanh(pattern_tanh) / (2.0 + EPSILON) + 0.5         # (1,C,H,W)
    pattern = (pattern - mean[None, :, None, None]) / std[None, :, None, None]
    blended = (1.0 - mask) * x + mask * pattern                      # (n,C,H,W)
    return blended.reshape(x.shape[0], -1) @ w_flat + b[None, :]


if __name__ == "__main__":
    key = jax.random.PRNGKey(0)
    k1, k2, k3, k4, k5 = jax.random.split(key, 5)

    # inputs / parameters (deterministic, synthetic)
    x = jax.random.normal(k1, (N, C, H, W), jnp.float32)
    mask_tanh = 0.1 * jax.random.normal(k2, (1, H, W), jnp.float32)        # init_mask param
    pattern_tanh = 0.1 * jax.random.normal(k3, (1, C, H, W), jnp.float32)  # init_pattern param
    w_flat = 0.02 * jax.random.normal(k4, (C * H * W, K), jnp.float32)     # frozen classifier weight
    b = 0.01 * jax.random.normal(k5, (K,), jnp.float32)                    # frozen classifier bias

    # cifar10 normalizer constants from the module
    mean = jnp.array([0.4914, 0.4822, 0.4465], jnp.float32)
    std = jnp.array([0.247, 0.243, 0.261], jnp.float32)

    # --- frozen-constant packing: once, outside the optimization-step path ---
    const_rows, w_t, b_pad = pack_frozen_constants(w_flat, b, mean, std)
    const_rows, w_t, b_pad = jax.block_until_ready((const_rows, w_t, b_pad))

    out = regression_forward(x, mask_tanh, pattern_tanh, const_rows, w_t, b_pad)
    out = jax.block_until_ready(out)

    ref = regression_reference(x, mask_tanh, pattern_tanh, mean, std, w_flat, b)
    assert out.shape == (N, K)
    # tolerance loosened vs. pure-f32 reference because the frozen weight is stored in bf16
    assert jnp.allclose(out, ref, atol=2e-2, rtol=2e-2), (out, ref)

    print("KERNEL_OK")
</pallas_src>

<mosaic_0001>
module attributes {stable_mosaic.version = 11 : i64} {
  func.func @regression_kernel(%arg0: i32, %arg1: memref<8x768xf32, #tpu.memory_space<vmem>>, %arg2: memref<4x768xf32, #tpu.memory_space<vmem>>, %arg3: memref<16x768xbf16, #tpu.memory_space<vmem>>, %arg4: memref<1x16xf32, #tpu.memory_space<vmem>>, %arg5: memref<8x16xf32, #tpu.memory_space<vmem>>) attributes {dimension_semantics = [#tpu.dimension_semantics<parallel>], iteration_bounds = array<i64: 1>, scalar_prefetch = 0 : i64, scratch_operands = 0 : i64, tpu.core_type = #tpu.core_type<tc>, window_params = [{transform_indices = @transform_0, window_bounds = array<i64: 8, 768>}, {pipeline_mode = #tpu.pipeline_mode<synchronous>, transform_indices = @transform_1, window_bounds = array<i64: 4, 768>}, {pipeline_mode = #tpu.pipeline_mode<synchronous>, transform_indices = @transform_2, window_bounds = array<i64: 16, 768>}, {pipeline_mode = #tpu.pipeline_mode<synchronous>, transform_indices = @transform_3, window_bounds = array<i64: 1, 16>}, {transform_indices = @transform_4, window_bounds = array<i64: 8, 16>}]} {
    %c0 = arith.constant 0 : index
    %c0_0 = arith.constant 0 : index
    %0 = vector.load %arg2[%c0, %c0_0] : memref<4x768xf32, #tpu.memory_space<vmem>>, vector<1x768xf32>
    %1 = math.tanh %0 : vector<1x768xf32>
    %cst = arith.constant 0.49999997 : f32
    %2 = vector.broadcast %cst : f32 to vector<1x768xf32>
    %3 = arith.mulf %1, %2 : vector<1x768xf32>
    %cst_1 = arith.constant 5.000000e-01 : f32
    %4 = vector.broadcast %cst_1 : f32 to vector<1x768xf32>
    %5 = arith.addf %3, %4 : vector<1x768xf32>
    %c1 = arith.constant 1 : index
    %c0_2 = arith.constant 0 : index
    %6 = vector.load %arg2[%c1, %c0_2] : memref<4x768xf32, #tpu.memory_space<vmem>>, vector<1x768xf32>
    %7 = math.tanh %6 : vector<1x768xf32>
    %cst_3 = arith.constant 0.49999997 : f32
    %8 = vector.broadcast %cst_3 : f32 to vector<1x768xf32>
    %9 = arith.mulf %7, %8 : vector<1x768xf32>
    %cst_4 = arith.constant 5.000000e-01 : f32
    %10 = vector.broadcast %cst_4 : f32 to vector<1x768xf32>
    %11 = arith.addf %9, %10 : vector<1x768xf32>
    %c2 = arith.constant 2 : index
    %c0_5 = arith.constant 0 : index
    %12 = vector.load %arg2[%c2, %c0_5] : memref<4x768xf32, #tpu.memory_space<vmem>>, vector<1x768xf32>
    %13 = arith.mulf %11, %12 : vector<1x768xf32>
    %c3 = arith.constant 3 : index
    %c0_6 = arith.constant 0 : index
    %14 = vector.load %arg2[%c3, %c0_6] : memref<4x768xf32, #tpu.memory_space<vmem>>, vector<1x768xf32>
    %15 = arith.addf %13, %14 : vector<1x768xf32>
    %c0_7 = arith.constant 0 : index
    %c0_8 = arith.constant 0 : index
    %16 = vector.load %arg1[%c0_7, %c0_8] : memref<8x768xf32, #tpu.memory_space<vmem>>, vector<8x768xf32>
    %17 = vector.broadcast %15 : vector<1x768xf32> to vector<8x768xf32>
    %18 = arith.subf %17, %16 : vector<8x768xf32>
    %19 = vector.broadcast %5 : vector<1x768xf32> to vector<8x768xf32>
    %20 = arith.mulf %19, %18 : vector<8x768xf32>
    %21 = arith.addf %16, %20 : vector<8x768xf32>
    %22 = arith.truncf %21 : vector<8x768xf32> to vector<8x768xbf16>
    %c0_9 = arith.constant 0 : index
    %c0_10 = arith.constant 0 : index
    %23 = vector.load %arg3[%c0_9, %c0_10] : memref<16x768xbf16, #tpu.memory_space<vmem>>, vector<16x768xbf16>
    %cst_11 = arith.constant dense<0.000000e+00> : vector<8x16xf32>
    %24 = tpu.matmul %22, %23, %cst_11 {dimension_numbers = #tpu.dot_dimension_numbers<[1], [1], [0], [0], [0, 0, 1, 0], [], []>} : vector<8x768xbf16>, vector<16x768xbf16>, vector<8x16xf32> -> vector<8x16xf32>
    %c0_12 = arith.constant 0 : index
    %c0_13 = arith.constant 0 : index
    %25 = vector.load %arg4[%c0_12, %c0_13] : memref<1x16xf32, #tpu.memory_space<vmem>>, vector<1x16xf32>
    %26 = vector.broadcast %25 : vector<1x16xf32> to vector<8x16xf32>
    %27 = arith.addf %24, %26 : vector<8x16xf32>
    %c0_14 = arith.constant 0 : index
    %c0_15 = arith.constant 0 : index
    %28 = vector.load %arg5[%c0_14, %c0_15] : memref<8x16xf32, #tpu.memory_space<vmem>>, vector<8x16xf32>
    tpu.vector_store %arg5[%c0_14, %c0_15], %27 {strides = array<i32>} : memref<8x16xf32, #tpu.memory_space<vmem>>, vector<8x16xf32>,
    return
  }
  func.func @transform_0(%arg0: i32) -> (i32, i32) {
    %c0_i32 = arith.constant 0 : i32
    %c0_i32_0 = arith.constant 0 : i32
    return %arg0, %c0_i32 : i32, i32
  }
  func.func @transform_1(%arg0: i32) -> (i32, i32) {
    %c0_i32 = arith.constant 0 : i32
    %c0_i32_0 = arith.constant 0 : i32
    %c0_i32_1 = arith.constant 0 : i32
    return %c0_i32, %c0_i32_0 : i32, i32
  }
  func.func @transform_2(%arg0: i32) -> (i32, i32) {
    %c0_i32 = arith.constant 0 : i32
    %c0_i32_0 = arith.constant 0 : i32
    %c0_i32_1 = arith.constant 0 : i32
    return %c0_i32, %c0_i32_0 : i32, i32
  }
  func.func @transform_3(%arg0: i32) -> (i32, i32) {
    %c0_i32 = arith.constant 0 : i32
    %c0_i32_0 = arith.constant 0 : i32
    %c0_i32_1 = arith.constant 0 : i32
    return %c0_i32, %c0_i32_0 : i32, i32
  }
  func.func @transform_4(%arg0: i32) -> (i32, i32) {
    %c0_i32 = arith.constant 0 : i32
    %c0_i32_0 = arith.constant 0 : i32
    return %arg0, %c0_i32 : i32, i32
  }
}

</mosaic_0001>

<llo_original>
// kernel: tpu_custom_call.1
$region0: #{tpu_custom_call.1}
  #allocation0 [shape = 'u32[]', space=smem, size = 0x4, offset = 0x4, fixed_abs, tag = 'smem constant byte address 0x4 - core index']
  #allocation1 [shape = 'u32[144,128]{1,0:T(1,128)}', space=vmem, size = 0x12000, scoped, tag = 'internal scratch']
  %s0 = inlined_call_operand.hbm [shape: f32[8,768], index: 0, kind: input, shape index: {}]
  %s1 = inlined_call_operand.hbm [shape: f32[4,768], index: 1, kind: input, shape index: {}]
  %s2 = inlined_call_operand.hbm [shape: bf16[16,768], index: 2, kind: input, shape index: {}]
  %s3 = inlined_call_operand.vmem [shape: f32[1,16], index: 3, kind: input, shape index: {}]
  %s4 = inlined_call_operand.hbm [shape: f32[8,16], index: 4, kind: output, shape index: {}]
  %s5 = sld [smem:[#allocation0]]
  $region38: #{tpu_custom_call.1} parent=0
    _
  %s7 = ssub.s32 1, %s5
  %s8 = scalar_select 0, %s7, %s5
  $region1: #{tpu_custom_call.1} parent=0
    #allocation2 [shape = 'u8[24576]{0}', space=vmem, size = 0x6000, scoped, tag = 'input window, operand 0, single buffered']
    #allocation3 [shape = 's32[1]{0}', space=sflag, size = 0x4, scoped, tag = 'scoped memory for tpu_custom_call.1']
    #allocation4 [shape = 's32[1]{0}', space=sflag, size = 0x4, scoped, tag = 'scoped memory for tpu_custom_call.1']
    #allocation5 [shape = 'u8[12288]{0}', space=vmem, size = 0x3000, scoped, tag = 'input window, operand 1, single buffered']
    #allocation6 [shape = 's32[1]{0}', space=sflag, size = 0x4, scoped, tag = 'scoped memory for tpu_custom_call.1']
    #allocation7 [shape = 'u8[24576]{0}', space=vmem, size = 0x6000, scoped, tag = 'input window, operand 2, single buffered']
    #allocation8 [shape = 'u8[4096]{0}', space=vmem, size = 0x1000, scoped, tag = 'output window, operand 0, single buffered']
    %9 = vsyncpa [#allocation3], 0
    %10 = vsyncpa [#allocation6], 0
    %11 = vsyncpa [#allocation4], 0
    // Predicated region
    $region2: #{tpu_custom_call.1} parent=1 // pred_check
      _
    $region3: #{tpu_custom_call.1} parent=1 // pred_check_branch
      %13 = sbr.rel (0) target = $region5
    $region4: #{tpu_custom_call.1} parent=1 // pred_region
      %s15 = ssub.s32 768, 768
      %16 = vsyncadd [#allocation3], %s15
      %s18 = sshll.u32 [#allocation2], 4
      %s19 = int_to_ptr.vmem [resolvable:$true] %s18
      %21 = dma.hbm_to_vmem [thread:$0]  %s0, 768, %s19, [#allocation3]
    $region5: #{tpu_custom_call.1} parent=1 // pred_fallthru
      _
    // Predicated region
    $region6: #{tpu_custom_call.1} parent=1 // pred_check
      _
    $region7: #{tpu_custom_call.1} parent=1 // pred_check_branch
      %23 = sbr.rel (0) target = $region9
    $region8: #{tpu_custom_call.1} parent=1 // pred_region
      %s25 = ssub.s32 384, 384
      %26 = vsyncadd [#allocation6], %s25
      %s28 = sshll.u32 [#allocation5], 4
      %s29 = int_to_ptr.vmem [resolvable:$true] %s28
      %31 = dma.hbm_to_vmem [thread:$0]  %s1, 384, %s29, [#allocation6]
    $region9: #{tpu_custom_call.1} parent=1 // pred_fallthru
      _
    // Predicated region
    $region10: #{tpu_custom_call.1} parent=1 // pred_check
      _
    $region11: #{tpu_custom_call.1} parent=1 // pred_check_branch
      %33 = sbr.rel (0) target = $region13
    $region12: #{tpu_custom_call.1} parent=1 // pred_region
      %s35 = ssub.s32 768, 768
      %36 = vsyncadd [#allocation6], %s35
      %s37 = sshll.u32 [#allocation7], 4
      %s38 = int_to_ptr.vmem [resolvable:$true] %s37
      %43 = dma.hbm_to_vmem [thread:$0]  %s2, 768, %s38, [#allocation6], 384, 384, 24
    $region13: #{tpu_custom_call.1} parent=1 // pred_fallthru
      _
    // Predicated region
    $region14: #{tpu_custom_call.1} parent=1 // pred_check
      _
    $region15: #{tpu_custom_call.1} parent=1 // pred_check_branch
      %45 = sbr.rel (0) target = $region17
    $region16: #{tpu_custom_call.1} parent=1 // pred_region
      _
    $region17: #{tpu_custom_call.1} parent=1 // pred_fallthru
      _
    // Predicated region
    $region18: #{tpu_custom_call.1} parent=1 // pred_check
      _
    $region19: #{tpu_custom_call.1} parent=1 // pred_check_branch
      %47 = sbr.rel (0) target = $region21
    $region20: #{tpu_custom_call.1} parent=1 // pred_region
      %48 = dma.done [#allocation3], 768
    $region21: #{tpu_custom_call.1} parent=1 // pred_fallthru
      _
    // Predicated region
    $region22: #{tpu_custom_call.1} parent=1 // pred_check
      _
    $region23: #{tpu_custom_call.1} parent=1 // pred_check_branch
      %50 = sbr.rel (0) target = $region25
    $region24: #{tpu_custom_call.1} parent=1 // pred_region
      %51 = dma.done [#allocation6], 384
    $region25: #{tpu_custom_call.1} parent=1 // pred_fallthru
      _
    // Predicated region
    $region26: #{tpu_custom_call.1} parent=1 // pred_check
      _
    $region27: #{tpu_custom_call.1} parent=1 // pred_check_branch
      %53 = sbr.rel (0) target = $region29
    $region28: #{tpu_custom_call.1} parent=1 // pred_region
      %54 = dma.done [#allocation6], 768
    $region29: #{tpu_custom_call.1} parent=1 // pred_fallthru
      _
    %v56 = vld [vmem:[#allocation5] ss:$4 sm:$0x3f]
    %v57 = vtanh.pop %v56
    %v58 = vmul.f32 %v57, 0.49999997
    %v59 = vadd.f32 %v58, 0.5
    %s60 = scalar_lea.vmem [#allocation5], 1
    %v61 = vld [vmem:[%s60] ss:$4 sm:$0x3f]
    %v62 = vtanh.pop %v61
    %v63 = vmul.f32 %v62, 0.49999997
    %v64 = vadd.f32 %v63, 0.5
    %s65 = scalar_lea.vmem [#allocation5], 2
    %v66 = vld [vmem:[%s65] ss:$4 sm:$0x3f]
    %v67 = vmul.f32 %v64, %v66
    %s68 = scalar_lea.vmem [#allocation5], 3
    %v69 = vld [vmem:[%s68] ss:$4 sm:$0x3f]
    %v70 = vadd.f32 %v67, %v69
    %v71 = vld [vmem:[#allocation2] sm:$0xff]
    %v72 = vld [vmem:[#allocation2 + $0x8] sm:$0xff]
    %v73 = vld [vmem:[#allocation2 + $0x10] sm:$0xff]
    %v74 = vld [vmem:[#allocation2 + $0x18] sm:$0xff]
    %v75 = vld [vmem:[#allocation2 + $0x20] sm:$0xff]
    %v76 = vld [vmem:[#allocation2 + $0x28] sm:$0xff]
    %v78 = vlaneseq
    %v79 = vshrl.u32 %v78, 7
    %v80 = vsub.s32 0, %v79
    %v81 = vrot.slane %v70, %v80
    %v82 = vlaneseq
    %v83 = vshrl.u32 %v82, 7
    %v84 = vsub.s32 1, %v83
    %v85 = vrot.slane %v70, %v84
    %v86 = vlaneseq
    %v87 = vshrl.u32 %v86, 7
    %v88 = vsub.s32 2, %v87
    %v89 = vrot.slane %v70, %v88
    %v90 = vlaneseq
    %v91 = vshrl.u32 %v90, 7
    %v92 = vsub.s32 3, %v91
    %v93 = vrot.slane %v70, %v92
    %v94 = vlaneseq
    %v95 = vshrl.u32 %v94, 7
    %v96 = vsub.s32 4, %v95
    %v97 = vrot.slane %v70, %v96
    %v98 = vlaneseq
    %v99 = vshrl.u32 %v98, 7
    %v100 = vsub.s32 5, %v99
    %v101 = vrot.slane %v70, %v100
    %v108 = vsub.f32 %v81, %v71
    %v109 = vsub.f32 %v85, %v72
    %v110 = vsub.f32 %v89, %v73
    %v111 = vsub.f32 %v93, %v74
    %v112 = vsub.f32 %v97, %v75
    %v113 = vsub.f32 %v101, %v76
    %v115 = vlaneseq
    %v116 = vshrl.u32 %v115, 7
    %v117 = vsub.s32 0, %v116
    %v118 = vrot.slane %v59, %v117
    %v119 = vlaneseq
    %v120 = vshrl.u32 %v119, 7
    %v121 = vsub.s32 1, %v120
    %v122 = vrot.slane %v59, %v121
    %v123 = vlaneseq
    %v124 = vshrl.u32 %v123, 7
    %v125 = vsub.s32 2, %v124
    %v126 = vrot.slane %v59, %v125
    %v127 = vlaneseq
    %v128 = vshrl.u32 %v127, 7
    %v129 = vsub.s32 3, %v128
    %v130 = vrot.slane %v59, %v129
    %v131 = vlaneseq
    %v132 = vshrl.u32 %v131, 7
    %v133 = vsub.s32 4, %v132
    %v134 = vrot.slane %v59, %v133
    %v135 = vlaneseq
    %v136 = vshrl.u32 %v135, 7
    %v137 = vsub.s32 5, %v136
    %v138 = vrot.slane %v59, %v137
    %v145 = vmul.f32 %v118, %v108
    %v146 = vmul.f32 %v122, %v109
    %v147 = vmul.f32 %v126, %v110
    %v148 = vmul.f32 %v130, %v111
    %v149 = vmul.f32 %v134, %v112
    %v150 = vmul.f32 %v138, %v113
    %v151 = vadd.f32 %v71, %v145
    %v152 = vadd.f32 %v72, %v146
    %v153 = vadd.f32 %v73, %v147
    %v154 = vadd.f32 %v74, %v148
    %v155 = vadd.f32 %v75, %v149
    %v156 = vadd.f32 %v76, %v150
    %v157 = vpack.c.bf16 %v151, %v151
    %v158 = vpack.c.bf16 %v152, %v152
    %v159 = vpack.c.bf16 %v153, %v153
    %v160 = vpack.c.bf16 %v154, %v154
    %v161 = vpack.c.bf16 %v155, %v155
    %v162 = vpack.c.bf16 %v156, %v156
    %v163 = vld [vmem:[#allocation7] sm:$0xff]
    %v164 = vld [vmem:[#allocation7 + $0x8] sm:$0xff]
    %v165 = vld [vmem:[#allocation7 + $0x10] sm:$0xff]
    %v166 = vld [vmem:[#allocation7 + $0x18] sm:$0xff]
    %v167 = vld [vmem:[#allocation7 + $0x20] sm:$0xff]
    %v168 = vld [vmem:[#allocation7 + $0x28] sm:$0xff]
    %v169 = vld [vmem:[%s3] sm:$0x1]
    %v171 = vlaneseq
    %v172 = vshrl.u32 %v171, 7
    %v173 = vsub.s32 0, %v172
    %v174 = vrot.slane %v169, %v173
    %v182 = vunpack.c.l.b16 %v163
    %v183 = vunpack.c.h.b16 %v163
    %v184 = vunpack.c.l.b16 %v164
    %v185 = vunpack.c.h.b16 %v164
    %v186 = vunpack.c.l.b16 %v165
    %v187 = vunpack.c.h.b16 %v165
    %v188 = vunpack.c.l.b16 %v166
    %v189 = vunpack.c.h.b16 %v166
    %v190 = vunpack.c.l.b16 %v167
    %v191 = vunpack.c.h.b16 %v167
    %v192 = vunpack.c.l.b16 %v168
    %v193 = vunpack.c.h.b16 %v168
    %v194 = vpack.c.b16 %v188, %v182
    %v195 = vpack.c.b16 %v189, %v183
    %v196 = vpack.c.b16 %v190, %v184
    %v197 = vpack.c.b16 %v191, %v185
    %v198 = vpack.c.b16 %v192, %v186
    %v199 = vpack.c.b16 %v193, %v187
    %206 = vmatprep.subr.bf16.mxu0 %v195
    %207 = vmatpush1.bf16.xpose.msra.mxu0 %v194
    %208 = vmatprep.subr.bf16.mxu0 0
    %209 = vmatpush1.bf16.xpose.msra.mxu0 0
    %210 = vmatprep.subr.bf16.mxu0 0
    %211 = vmatpush1.bf16.xpose.msra.mxu0 0
    %212 = vmatprep.subr.bf16.mxu0 0
    %213 = vmatpush1.bf16.xpose.msra.mxu0 0
    %214 = vmatprep.subr.bf16.mxu0 0
    %215 = vmatpush1.bf16.xpose.msra.mxu0 0
    %216 = vmatprep.subr.bf16.mxu0 0
    %217 = vmatpush1.bf16.xpose.msra.mxu0 0
    %218 = vmatprep.subr.bf16.mxu0 0
    %219 = vmatpush1.bf16.xpose.msra.mxu0 0
    %220 = vmatprep.subr.bf16.mxu0 0
    %221 = vmatpush1.bf16.xpose.msra.mxu0 0
    %222 = vmatprep.subr.bf16.mxu0 0
    %223 = vmatpush1.bf16.xpose.msra.mxu0 0
    %224 = vmatprep.subr.bf16.mxu0 0
    %225 = vmatpush1.bf16.xpose.msra.mxu0 0
    %226 = vmatprep.subr.bf16.mxu0 0
    %227 = vmatpush1.bf16.xpose.msra.mxu0 0
    %228 = vmatprep.subr.bf16.mxu0 0
    %229 = vmatpush1.bf16.xpose.msra.mxu0 0
    %230 = vmatprep.subr.bf16.mxu0 0
    %231 = vmatpush1.bf16.xpose.msra.mxu0 0
    %232 = vmatprep.subr.bf16.mxu0 0
    %233 = vmatpush1.bf16.xpose.msra.mxu0 0
    %234 = vmatprep.subr.bf16.mxu0 0
    %235 = vmatpush1.bf16.xpose.msra.mxu0 0
    %236 = vmatprep.subr.bf16.mxu0 0
    %237 = vmatpush1.bf16.xpose.msra.mxu0 0
    %238 = vmatprep.mubr.bf16.mxu0 %v158
    %239 = vmatmul.mubr.bf16.gmra.mrb[0].mxu0 %v157
    %v240 = vpop.f32.mrb[0].mxu0
    %v241 = vadd.f32 %v174, %v240
    %v242 = vpop.f32.mrb[0].mxu0
    %v243 = vpop.f32.mrb[0].mxu0
    %v244 = vpop.f32.mrb[0].mxu0
    %245 = vdwg.mxu0
    %246 = vmatprep.subr.bf16.mxu0 %v197
    %247 = vmatpush1.bf16.xpose.msra.mxu0 %v196
    %248 = vmatprep.subr.bf16.mxu0 0
    %249 = vmatpush1.bf16.xpose.msra.mxu0 0
    %250 = vmatprep.subr.bf16.mxu0 0
    %251 = vmatpush1.bf16.xpose.msra.mxu0 0
    %252 = vmatprep.subr.bf16.mxu0 0
    %253 = vmatpush1.bf16.xpose.msra.mxu0 0
    %254 = vmatprep.subr.bf16.mxu0 0
    %255 = vmatpush1.bf16.xpose.msra.mxu0 0
    %256 = vmatprep.subr.bf16.mxu0 0
    %257 = vmatpush1.bf16.xpose.msra.mxu0 0
    %258 = vmatprep.subr.bf16.mxu0 0
    %259 = vmatpush1.bf16.xpose.msra.mxu0 0
    %260 = vmatprep.subr.bf16.mxu0 0
    %261 = vmatpush1.bf16.xpose.msra.mxu0 0
    %262 = vmatprep.subr.bf16.mxu0 0
    %263 = vmatpush1.bf16.xpose.msra.mxu0 0
    %264 = vmatprep.subr.bf16.mxu0 0
    %265 = vmatpush1.bf16.xpose.msra.mxu0 0
    %266 = vmatprep.subr.bf16.mxu0 0
    %267 = vmatpush1.bf16.xpose.msra.mxu0 0
    %268 = vmatprep.subr.bf16.mxu0 0
    %269 = vmatpush1.bf16.xpose.msra.mxu0 0
    %270 = vmatprep.subr.bf16.mxu0 0
    %271 = vmatpush1.bf16.xpose.msra.mxu0 0
    %272 = vmatprep.subr.bf16.mxu0 0
    %273 = vmatpush1.bf16.xpose.msra.mxu0 0
    %274 = vmatprep.subr.bf16.mxu0 0
    %275 = vmatpush1.bf16.xpose.msra.mxu0 0
    %276 = vmatprep.subr.bf16.mxu0 0
    %277 = vmatpush1.bf16.xpose.msra.mxu0 0
    %278 = vmatprep.mubr.bf16.mxu0 %v160
    %279 = vmatmul.mubr.bf16.gmra.mrb[0].mxu0 %v159
    %v280 = vpop.f32.mrb[0].mxu0
    %v281 = vadd.f32 %v241, %v280
    %v282 = vpop.f32.mrb[0].mxu0
    %v283 = vpop.f32.mrb[0].mxu0
    %v284 = vpop.f32.mrb[0].mxu0
    %285 = vdwg.mxu0
    %286 = vmatprep.subr.bf16.mxu0 %v199
    %287 = vmatpush1.bf16.xpose.msra.mxu0 %v198
    %288 = vmatprep.subr.bf16.mxu0 0
    %289 = vmatpush1.bf16.xpose.msra.mxu0 0
    %290 = vmatprep.subr.bf16.mxu0 0
    %291 = vmatpush1.bf16.xpose.msra.mxu0 0
    %292 = vmatprep.subr.bf16.mxu0 0
    %293 = vmatpush1.bf16.xpose.msra.mxu0 0
    %294 = vmatprep.subr.bf16.mxu0 0
    %295 = vmatpush1.bf16.xpose.msra.mxu0 0
    %296 = vmatprep.subr.bf16.mxu0 0
    %297 = vmatpush1.bf16.xpose.msra.mxu0 0
    %298 = vmatprep.subr.bf16.mxu0 0
    %299 = vmatpush1.bf16.xpose.msra.mxu0 0
    %300 = vmatprep.subr.bf16.mxu0 0
    %301 = vmatpush1.bf16.xpose.msra.mxu0 0
    %302 = vmatprep.subr.bf16.mxu0 0
    %303 = vmatpush1.bf16.xpose.msra.mxu0 0
    %304 = vmatprep.subr.bf16.mxu0 0
    %305 = vmatpush1.bf16.xpose.msra.mxu0 0
    %306 = vmatprep.subr.bf16.mxu0 0
    %307 = vmatpush1.bf16.xpose.msra.mxu0 0
    %308 = vmatprep.subr.bf16.mxu0 0
    %309 = vmatpush1.bf16.xpose.msra.mxu0 0
    %310 = vmatprep.subr.bf16.mxu0 0
    %311 = vmatpush1.bf16.xpose.msra.mxu0 0
    %312 = vmatprep.subr.bf16.mxu0 0
    %313 = vmatpush1.bf16.xpose.msra.mxu0 0
    %314 = vmatprep.subr.bf16.mxu0 0
    %315 = vmatpush1.bf16.xpose.msra.mxu0 0
    %316 = vmatprep.subr.bf16.mxu0 0
    %317 = vmatpush1.bf16.xpose.msra.mxu0 0
    %318 = vmatprep.mubr.bf16.mxu0 %v162
    %319 = vmatmul.mubr.bf16.gmra.mrb[0].mxu0 %v161
    %v320 = vpop.f32.mrb[0].mxu0
    %v321 = vadd.f32 %v281, %v320
    %v322 = vpop.f32.mrb[0].mxu0
    %v323 = vpop.f32.mrb[0].mxu0
    %v324 = vpop.f32.mrb[0].mxu0
    %325 = vdwg.mxu0
    %vm326 = vcmask 130048
    %327 = vst.msk [vmem:[#allocation8] sm:$0xff] %vm326, %v321
    // Predicated region
    $region30: #{tpu_custom_call.1} parent=1 // pred_check
      _
    $region31: #{tpu_custom_call.1} parent=1 // pred_check_branch
      %329 = sbr.rel (0) target = $region33
    $region32: #{tpu_custom_call.1} parent=1 // pred_region
      %s331 = ssub.s32 128, 128
      %332 = vsyncadd [#allocation4], %s331
      %s334 = sshll.u32 [#allocation8], 4
      %s335 = int_to_ptr.vmem [resolvable:$true] %s334
      %337 = dma.vmem_to_hbm [thread:$0]  %s335, 128, %s4, [#allocation4]
    $region33: #{tpu_custom_call.1} parent=1 // pred_fallthru
      _
    // Predicated region
    $region34: #{tpu_custom_call.1} parent=1 // pred_check
      _
    $region35: #{tpu_custom_call.1} parent=1 // pred_check_branch
      %339 = sbr.rel (0) target = $region37
    $region36: #{tpu_custom_call.1} parent=1 // pred_region
      %340 = dma.done [#allocation4], 128
    $region37: #{tpu_custom_call.1} parent=1 // pred_fallthru
      _
    %341 = vsyncpa [#allocation3], 1
    %342 = vsyncpa [#allocation6], 1
    %343 = vsyncpa [#allocation4], 1

</llo_original>
